<compile_context>
chip_gen: v7x
topology: tpu7x:2x2x1
jax: 0.10.0
libtpu: 0.0.40
codegen_flags: <defaults>
</compile_context>

<pallas_src>
import functools

import jax
import jax.numpy as jnp
from jax.experimental import pallas as pl
from jax.experimental.pallas import tpu as pltpu

LANES = 128
MAX_ROW_TILE = 4096  # (4096,128) f32 = 2 MiB/block -> 8 MiB w/ double buffering


def _round_up(x, m):
    return ((x + m - 1) // m) * m


def _iou_partial_kernel(x_ref, y_ref, inter_ref, total_ref, *,
                        rows, total_steps, steps_per_core):
    """Accumulates per-core (8,128) f32 partials of intersection and total."""
    c = pl.program_id(0)   # core-split ("parallel") axis
    i = pl.program_id(1)   # row-tile ("arbitrary") axis
    row_tile = x_ref.shape[0]

    # The (8,128) output blocks double as accumulators (resident across axis 1).
    @pl.when(i == 0)
    def _init():
        inter_ref[...] = jnp.zeros_like(inter_ref)
        total_ref[...] = jnp.zeros_like(total_ref)

    # Binarize in native dtype; widen targets once for f32 accumulation.
    x = x_ref[...]
    y = y_ref[...].astype(jnp.float32)
    m = x >= jnp.array(0.5, dtype=x.dtype)     # torch.where(x >= 0.5, 1, 0)
    inter_e = jnp.where(m, y, 0.0)             # bin * targets (select, no mul)
    total_e = y + m.astype(jnp.float32)        # bin + targets

    def fold(v):
        # (row_tile,128) -> (8,128): sum whole vregs. The reshape keeps the
        # minor (8,128) tile intact (layout-preserving); the axis-0 sum is
        # pure VALU adds, no XLU.
        return jnp.sum(v.reshape(row_tile // 8, 8, LANES), axis=0)

    g = c * steps_per_core + i                  # global row-tile index

    needs_mask = (rows % row_tile != 0) or (2 * steps_per_core != total_steps)
    if needs_mask:
        # Unmasked fast path for every full tile; masked path only for the
        # last (possibly partial) tile and any dummy step of the other core.
        @pl.when(g < total_steps - 1)
        def _full():
            inter_ref[...] += fold(inter_e)
            total_ref[...] += fold(total_e)

        @pl.when(g >= total_steps - 1)
        def _tail():
            row_idx = g * row_tile + jax.lax.broadcasted_iota(
                jnp.int32, (row_tile, LANES), 0)
            valid = row_idx < rows
            # select (not multiply): garbage NaN/Inf in OOB rows cannot leak.
            inter_ref[...] += fold(jnp.where(valid, inter_e, 0.0))
            total_ref[...] += fold(jnp.where(valid, total_e, 0.0))
    else:
        inter_ref[...] += fold(inter_e)
        total_ref[...] += fold(total_e)


def iou_loss_integer(inputs, targets, smooth=1.0):
    """Pallas equivalent of IoULoss_integer.forward. Returns a scalar f32."""
    smooth = float(smooth)
    if not jnp.issubdtype(inputs.dtype, jnp.floating):
        inputs = inputs.astype(jnp.float32)

    x = jnp.ravel(inputs)            # free flatten, native dtype
    y = jnp.ravel(targets)
    n = x.shape[0]

    rows = n // LANES                # 128-aligned prefix handled in-kernel
    tail = n - rows * LANES          # <=127 leftover elements handled in jnp

    if rows == 0:
        # Smaller than one lane row: nothing to tile, plain jnp.
        xb = x >= 0.5
        yt = y.astype(jnp.float32)
        inter = jnp.sum(jnp.where(xb, yt, 0.0))
        total = jnp.sum(yt) + jnp.sum(xb.astype(jnp.float32))
        return 1.0 - (inter + smooth) / (total - inter + smooth)

    # Lane-dense (rows, 128) view of the aligned prefix. When numel % 128 == 0
    # this is a pure reshape of the full array -> zero extra HBM traffic.
    if tail:
        x2 = x[:rows * LANES].reshape(rows, LANES)
        y2 = y[:rows * LANES].reshape(rows, LANES)
    else:
        x2 = x.reshape(rows, LANES)
        y2 = y.reshape(rows, LANES)

    # Row tile: sublane-aligned, sized so both TensorCores (v7x) get work.
    row_tile = min(MAX_ROW_TILE, _round_up(pl.cdiv(rows, 2), 8))
    total_steps = pl.cdiv(rows, row_tile)          # number of real row tiles
    steps_per_core = pl.cdiv(total_steps, 2)
    grid = (2, steps_per_core)                     # (core split, row tiles)

    if 2 * steps_per_core == total_steps:
        idx = lambda c, i: (c * steps_per_core + i, 0)
    else:
        # Odd tile count: one core gets a dummy step; wrap its block index
        # back in range (its contribution is masked off inside the kernel).
        idx = lambda c, i: ((c * steps_per_core + i) % total_steps, 0)

    kernel = functools.partial(
        _iou_partial_kernel, rows=rows, total_steps=total_steps,
        steps_per_core=steps_per_core)

    inter_part, total_part = pl.pallas_call(
        kernel,
        out_shape=(jax.ShapeDtypeStruct((2, 8, LANES), jnp.float32),
                   jax.ShapeDtypeStruct((2, 8, LANES), jnp.float32)),
        grid=grid,
        in_specs=[
            pl.BlockSpec((row_tile, LANES), idx),
            pl.BlockSpec((row_tile, LANES), idx),
        ],
        out_specs=(
            pl.BlockSpec((None, 8, LANES), lambda c, i: (c, 0, 0)),
            pl.BlockSpec((None, 8, LANES), lambda c, i: (c, 0, 0)),
        ),
        compiler_params=pltpu.CompilerParams(
            # Axis 0 shards the row range across TensorCores (v7x megacore);
            # axis 1 carries the sequential accumulation.
            dimension_semantics=("parallel", "arbitrary")),
    )(x2, y2)

    intersection = jnp.sum(inter_part)
    total = jnp.sum(total_part)

    if tail:
        xt = x[rows * LANES:]
        yt = y[rows * LANES:].astype(jnp.float32)
        mt = xt >= 0.5
        intersection = intersection + jnp.sum(jnp.where(mt, yt, 0.0))
        total = total + jnp.sum(yt) + jnp.sum(mt.astype(jnp.float32))

    union = total - intersection
    return 1.0 - (intersection + smooth) / (union + smooth)


def _reference(inputs, targets, smooth=1.0):
    xf = jnp.ravel(inputs)
    xb = jnp.where(xf >= 0.5, 1.0, 0.0)
    yf = jnp.ravel(targets).astype(jnp.float32)
    inter = jnp.sum(xb * yf)
    total = jnp.sum(xb + yf)
    return 1.0 - (inter + smooth) / (total - inter + smooth)


if __name__ == "__main__":
    key = jax.random.PRNGKey(0)
    k1, k2, k3, k4 = jax.random.split(key, 4)

    # Segmentation-style input: [B, C, H, W] (128-aligned numel).
    shape = (2, 4, 16, 16)
    inputs = jax.nn.sigmoid(jax.random.normal(k1, shape, dtype=jnp.float32))
    targets = (jax.random.uniform(k2, shape) > 0.5).astype(jnp.float32)

    loss = iou_loss_integer(inputs, targets, smooth=1.0)
    jax.block_until_ready(loss)
    ref = _reference(inputs, targets, 1.0)
    assert jnp.allclose(loss, ref, rtol=1e-5, atol=1e-6), (loss, ref)

    # Unaligned numel: exercises the static partial-tile mask, the dummy-step
    # block-index wrap, and the wrapper-side tail path.
    shape2 = (2, 3, 11, 13)  # 858 elements
    inputs2 = jax.nn.sigmoid(jax.random.normal(k3, shape2, dtype=jnp.float32))
    targets2 = (jax.random.uniform(k4, shape2) > 0.5).astype(jnp.float32)

    loss2 = iou_loss_integer(inputs2, targets2, smooth=1.0)
    jax.block_until_ready(loss2)
    ref2 = _reference(inputs2, targets2, 1.0)
    assert jnp.allclose(loss2, ref2, rtol=1e-5, atol=1e-6), (loss2, ref2)

    print("KERNEL_OK")
</pallas_src>

<mosaic_0001>
module attributes {stable_mosaic.version = 11 : i64} {
  func.func @_iou_partial_kernel(%arg0: i32, %arg1: i32, %arg2: memref<8x128xf32, #tpu.memory_space<vmem>>, %arg3: memref<8x128xf32, #tpu.memory_space<vmem>>, %arg4: memref<1x8x128xf32, #tpu.memory_space<vmem>>, %arg5: memref<1x8x128xf32, #tpu.memory_space<vmem>>) attributes {dimension_semantics = [#tpu.dimension_semantics<parallel>, #tpu.dimension_semantics<arbitrary>], iteration_bounds = array<i64: 2, 1>, scalar_prefetch = 0 : i64, scratch_operands = 0 : i64, tpu.core_type = #tpu.core_type<tc>, window_params = [{transform_indices = @transform_0, window_bounds = array<i64: 8, 128>}, {transform_indices = @transform_1, window_bounds = array<i64: 8, 128>}, {transform_indices = @transform_2, window_bounds = array<i64: 1, 8, 128>}, {transform_indices = @transform_3, window_bounds = array<i64: 1, 8, 128>}]} {
    %c0_i32 = arith.constant 0 : i32
    %0 = arith.cmpi eq, %arg1, %c0_i32 : i32
    %1 = arith.extui %0 : i1 to i32
    %c0_i32_0 = arith.constant 0 : i32
    %2 = arith.cmpi ne, %1, %c0_i32_0 : i32
    scf.if %2 {
      %cst_19 = arith.constant 0.000000e+00 : f32
      %28 = vector.broadcast %cst_19 : f32 to vector<8x128xf32>
      %c0_20 = arith.constant 0 : index
      %c0_21 = arith.constant 0 : index
      %c0_22 = arith.constant 0 : index
      %29 = vector.load %arg4[%c0_20, %c0_21, %c0_22] : memref<1x8x128xf32, #tpu.memory_space<vmem>>, vector<1x8x128xf32>
      %30 = vector.shape_cast %29 : vector<1x8x128xf32> to vector<8x128xf32>
      %31 = vector.shape_cast %28 : vector<8x128xf32> to vector<1x8x128xf32>
      tpu.vector_store %arg4[%c0_20, %c0_21, %c0_22], %31 {strides = array<i32>} : memref<1x8x128xf32, #tpu.memory_space<vmem>>, vector<1x8x128xf32>,
      %cst_23 = arith.constant 0.000000e+00 : f32
      %32 = vector.broadcast %cst_23 : f32 to vector<8x128xf32>
      %c0_24 = arith.constant 0 : index
      %c0_25 = arith.constant 0 : index
      %c0_26 = arith.constant 0 : index
      %33 = vector.load %arg5[%c0_24, %c0_25, %c0_26] : memref<1x8x128xf32, #tpu.memory_space<vmem>>, vector<1x8x128xf32>
      %34 = vector.shape_cast %33 : vector<1x8x128xf32> to vector<8x128xf32>
      %35 = vector.shape_cast %32 : vector<8x128xf32> to vector<1x8x128xf32>
      tpu.vector_store %arg5[%c0_24, %c0_25, %c0_26], %35 {strides = array<i32>} : memref<1x8x128xf32, #tpu.memory_space<vmem>>, vector<1x8x128xf32>,
    } else {
    }
    %c0 = arith.constant 0 : index
    %c0_1 = arith.constant 0 : index
    %3 = vector.load %arg2[%c0, %c0_1] : memref<8x128xf32, #tpu.memory_space<vmem>>, vector<8x128xf32>
    %c0_2 = arith.constant 0 : index
    %c0_3 = arith.constant 0 : index
    %4 = vector.load %arg3[%c0_2, %c0_3] : memref<8x128xf32, #tpu.memory_space<vmem>>, vector<8x128xf32>
    %cst = arith.constant 5.000000e-01 : f32
    %5 = vector.broadcast %cst : f32 to vector<8x128xf32>
    %6 = arith.cmpf oge, %3, %5 : vector<8x128xf32>
    %cst_4 = arith.constant 0.000000e+00 : f32
    %7 = vector.broadcast %cst_4 : f32 to vector<8x128xf32>
    %8 = arith.select %6, %4, %7 : vector<8x128xi1>, vector<8x128xf32>
    %9 = arith.extui %6 : vector<8x128xi1> to vector<8x128xi32>
    %10 = arith.sitofp %9 : vector<8x128xi32> to vector<8x128xf32>
    %11 = arith.addf %4, %10 : vector<8x128xf32>
    %c0_5 = arith.constant 0 : index
    %c0_6 = arith.constant 0 : index
    %c0_7 = arith.constant 0 : index
    %12 = vector.load %arg4[%c0_5, %c0_6, %c0_7] : memref<1x8x128xf32, #tpu.memory_space<vmem>>, vector<1x8x128xf32>
    %13 = vector.shape_cast %12 : vector<1x8x128xf32> to vector<8x128xf32>
    %14 = vector.shape_cast %8 : vector<8x128xf32> to vector<1x8x128xf32>
    %cst_8 = arith.constant dense<0.000000e+00> : vector<8x128xf32>
    %15 = vector.multi_reduction <add>, %14, %cst_8 [0] : vector<1x8x128xf32> to vector<8x128xf32>
    %16 = arith.addf %13, %15 : vector<8x128xf32>
    %c0_9 = arith.constant 0 : index
    %c0_10 = arith.constant 0 : index
    %c0_11 = arith.constant 0 : index
    %17 = vector.load %arg4[%c0_9, %c0_10, %c0_11] : memref<1x8x128xf32, #tpu.memory_space<vmem>>, vector<1x8x128xf32>
    %18 = vector.shape_cast %17 : vector<1x8x128xf32> to vector<8x128xf32>
    %19 = vector.shape_cast %16 : vector<8x128xf32> to vector<1x8x128xf32>
    tpu.vector_store %arg4[%c0_9, %c0_10, %c0_11], %19 {strides = array<i32>} : memref<1x8x128xf32, #tpu.memory_space<vmem>>, vector<1x8x128xf32>,
    %c0_12 = arith.constant 0 : index
    %c0_13 = arith.constant 0 : index
    %c0_14 = arith.constant 0 : index
    %20 = vector.load %arg5[%c0_12, %c0_13, %c0_14] : memref<1x8x128xf32, #tpu.memory_space<vmem>>, vector<1x8x128xf32>
    %21 = vector.shape_cast %20 : vector<1x8x128xf32> to vector<8x128xf32>
    %22 = vector.shape_cast %11 : vector<8x128xf32> to vector<1x8x128xf32>
    %cst_15 = arith.constant dense<0.000000e+00> : vector<8x128xf32>
    %23 = vector.multi_reduction <add>, %22, %cst_15 [0] : vector<1x8x128xf32> to vector<8x128xf32>
    %24 = arith.addf %21, %23 : vector<8x128xf32>
    %c0_16 = arith.constant 0 : index
    %c0_17 = arith.constant 0 : index
    %c0_18 = arith.constant 0 : index
    %25 = vector.load %arg5[%c0_16, %c0_17, %c0_18] : memref<1x8x128xf32, #tpu.memory_space<vmem>>, vector<1x8x128xf32>
    %26 = vector.shape_cast %25 : vector<1x8x128xf32> to vector<8x128xf32>
    %27 = vector.shape_cast %24 : vector<8x128xf32> to vector<1x8x128xf32>
    tpu.vector_store %arg5[%c0_16, %c0_17, %c0_18], %27 {strides = array<i32>} : memref<1x8x128xf32, #tpu.memory_space<vmem>>, vector<1x8x128xf32>,
    return
  }
  func.func @transform_0(%arg0: i32, %arg1: i32) -> (i32, i32) {
    %c1_i32 = arith.constant 1 : i32
    %0 = arith.muli %arg0, %c1_i32 : i32
    %1 = arith.addi %0, %arg1 : i32
    %c0_i32 = arith.constant 0 : i32
    %c0_i32_0 = arith.constant 0 : i32
    return %1, %c0_i32 : i32, i32
  }
  func.func @transform_1(%arg0: i32, %arg1: i32) -> (i32, i32) {
    %c1_i32 = arith.constant 1 : i32
    %0 = arith.muli %arg0, %c1_i32 : i32
    %1 = arith.addi %0, %arg1 : i32
    %c0_i32 = arith.constant 0 : i32
    %c0_i32_0 = arith.constant 0 : i32
    return %1, %c0_i32 : i32, i32
  }
  func.func @transform_2(%arg0: i32, %arg1: i32) -> (i32, i32, i32) {
    %c0_i32 = arith.constant 0 : i32
    %c0_i32_0 = arith.constant 0 : i32
    %c0_i32_1 = arith.constant 0 : i32
    return %arg0, %c0_i32, %c0_i32_0 : i32, i32, i32
  }
  func.func @transform_3(%arg0: i32, %arg1: i32) -> (i32, i32, i32) {
    %c0_i32 = arith.constant 0 : i32
    %c0_i32_0 = arith.constant 0 : i32
    %c0_i32_1 = arith.constant 0 : i32
    return %arg0, %c0_i32, %c0_i32_0 : i32, i32, i32
  }
}

</mosaic_0001>

<llo_original>
// kernel: tpu_custom_call.1
$region0: #{tpu_custom_call.1}
  #allocation0 [shape = 'u32[]', space=smem, size = 0x4, offset = 0x4, fixed_abs, tag = 'smem constant byte address 0x4 - core index']
  #allocation1 [shape = 'u32[144,128]{1,0:T(1,128)}', space=vmem, size = 0x12000, scoped, tag = 'internal scratch']
  %s0 = inlined_call_operand.hbm [shape: f32[16,128], index: 0, kind: input, shape index: {}]
  %s1 = inlined_call_operand.hbm [shape: f32[16,128], index: 1, kind: input, shape index: {}]
  %s2 = inlined_call_operand.hbm [shape: f32[2,8,128], index: 2, kind: output, shape index: {0}]
  %s3 = inlined_call_operand.hbm [shape: f32[2,8,128], index: 3, kind: output, shape index: {1}]
  %4 = xla_tuple %s2, %s3
  %s5 = sld [smem:[#allocation0]]
  $region61: #{tpu_custom_call.1} parent=0
    _
  %s7 = ssub.s32 1, %s5
  %s8 = scalar_select 0, %s7, %s5
  $region1: #{tpu_custom_call.1} parent=0
    #allocation2 [shape = 'u8[8192]{0}', space=vmem, size = 0x2000, scoped, tag = 'input window, operand 0']
    #allocation3 [shape = 's32[2]{0}', space=sflag, size = 0x8, scoped, tag = 'scoped memory for tpu_custom_call.1']
    #allocation4 [shape = 's32[2]{0}', space=sflag, size = 0x8, scoped, tag = 'scoped memory for tpu_custom_call.1']
    #allocation5 [shape = 'u8[8192]{0}', space=vmem, size = 0x2000, scoped, tag = 'input window, operand 1']
    #allocation6 [shape = 's32[2]{0}', space=sflag, size = 0x8, scoped, tag = 'scoped memory for tpu_custom_call.1']
    #allocation7 [shape = 'u8[8192]{0}', space=vmem, size = 0x2000, scoped, tag = 'output window, operand 0']
    #allocation8 [shape = 'u8[8192]{0}', space=vmem, size = 0x2000, scoped, tag = 'output window, operand 1']
    #allocation9 [shape = 's32[2]{0}', space=sflag, size = 0x8, scoped, tag = 'scoped memory for tpu_custom_call.1']
    %9 = vsyncpa [#allocation3], 0
    %s10 = scalar_lea.sflag [#allocation3], 1
    %11 = vsyncpa %s10, 0
    %12 = vsyncpa [#allocation6], 0
    %s13 = scalar_lea.sflag [#allocation6], 1
    %14 = vsyncpa %s13, 0
    %15 = vsyncpa [#allocation4], 0
    %s16 = scalar_lea.sflag [#allocation4], 1
    %17 = vsyncpa %s16, 0
    %18 = vsyncpa [#allocation9], 0
    %s19 = scalar_lea.sflag [#allocation9], 1
    %20 = vsyncpa %s19, 0
    loop: start=0, step=1, limit=4
    $region2: #{tpu_custom_call.1} parent=1 // loop_pre_header
      _
    $region3: #{tpu_custom_call.1} parent=1 // loop_header
      %s22 = sphi 0, %s26
      %p23 = scmp.ge.s32.totalorder %s22, 4
      %s29 = sphi 0, %s41
      %s30 = sphi 0, %s37
      %s31 = sphi 0, %s29
      %s32 = sphi 0, %s30
      %s33 = sphi 0, %s31
      %s34 = sphi 0, %s32
      %s46 = sphi 0, %s48
      %s49 = sphi 0, %s46
      %s50 = sphi 0, %s49
      %s66 = sphi 0, %s50
      %s74 = sphi 0, %s76
      %s77 = sphi 0, %s74
      %s78 = sphi 0, %s77
      %s94 = sphi 0, %s78
      %s100 = sphi 0, %s102
      %s103 = sphi 0, %s100
      %s104 = sphi 0, %s103
      %s120 = sphi 0, %s104
      %s126 = sphi 0, %s128
      %s129 = sphi 0, %s126
      %s130 = sphi 0, %s129
      %s146 = sphi 0, %s130
    $region4: #{tpu_custom_call.1} parent=1 // loop_header_branch
      %25 = sbr.rel (%p23) target = $region8
    $region5: #{tpu_custom_call.1} parent=1 // loop_body
      %s27 = ssub.s32 %s22, 1
      %s28 = ssub.s32 %s22, 2
      %s35 = sadd.s32 1, %s30
      %p36 = scmp.ge.s32.totalorder %s35, 1
      %s37 = scalar_select %p36, 0, %s35
      %s38 = sadd.s32 1, %s29
      %s39 = scalar_select %p36, %s38, %s29
      %p40 = scmp.ge.s32.totalorder %s39, 2
      %s41 = scalar_select %p40, 0, %s39
      %s42 = sadd.s32 %s29, %s30
      %s43 = sadd.s32 %s41, %s37
      %s44 = ssub.s32 %s42, %s43
      %p45 = scmp.eq.s32.totalorder %s44, 0
      %s47 = sadd.s32 %s46, 1
      %s48 = scalar_select %p45, %s46, %s47
      %p51 = pneg %p45
      %p52 = scmp.eq.s32.totalorder %s22, 1
      %p53 = por %p51, %p52
      %p54 = scmp.ne.s32.totalorder %s46, %s49
      %p55 = scmp.eq.s32.totalorder %s22, 0
      %p56 = por %p54, %p55
      %p57 = scmp.ne.s32.totalorder %s46, %s49
      %p58 = scmp.eq.s32.totalorder %s27, 1
      %p59 = por %p57, %p58
      %p60 = scmp.ne.s32.totalorder %s49, %s50
      %p61 = scmp.eq.s32.totalorder %s27, 0
      %p62 = por %p60, %p61
      %p63 = scmp.ne.s32.totalorder %s49, %s50
      %p64 = scmp.eq.s32.totalorder %s28, 1
      %p65 = por %p63, %p64
      %p67 = scmp.ne.s32.totalorder %s50, %s66
      %p68 = scmp.eq.s32.totalorder %s28, 0
      %p69 = por %p67, %p68
      %s70 = sadd.s32 %s29, %s30
      %s71 = sadd.s32 %s41, %s37
      %s72 = ssub.s32 %s70, %s71
      %p73 = scmp.eq.s32.totalorder %s72, 0
      %s75 = sadd.s32 %s74, 1
      %s76 = scalar_select %p73, %s74, %s75
      %p79 = pneg %p73
      %p80 = scmp.eq.s32.totalorder %s22, 1
      %p81 = por %p79, %p80
      %p82 = scmp.ne.s32.totalorder %s74, %s77
      %p83 = scmp.eq.s32.totalorder %s22, 0
      %p84 = por %p82, %p83
      %p85 = scmp.ne.s32.totalorder %s74, %s77
      %p86 = scmp.eq.s32.totalorder %s27, 1
      %p87 = por %p85, %p86
      %p88 = scmp.ne.s32.totalorder %s77, %s78
      %p89 = scmp.eq.s32.totalorder %s27, 0
      %p90 = por %p88, %p89
      %p91 = scmp.ne.s32.totalorder %s77, %s78
      %p92 = scmp.eq.s32.totalorder %s28, 1
      %p93 = por %p91, %p92
      %p95 = scmp.ne.s32.totalorder %s78, %s94
      %p96 = scmp.eq.s32.totalorder %s28, 0
      %p97 = por %p95, %p96
      %s98 = ssub.s32 %s29, %s41
      %p99 = scmp.eq.s32.totalorder %s98, 0
      %s101 = sadd.s32 %s100, 1
      %s102 = scalar_select %p99, %s100, %s101
      %p105 = pneg %p99
      %p106 = scmp.eq.s32.totalorder %s22, 1
      %p107 = por %p105, %p106
      %p108 = scmp.ne.s32.totalorder %s100, %s103
      %p109 = scmp.eq.s32.totalorder %s22, 0
      %p110 = por %p108, %p109
      %p111 = scmp.ne.s32.totalorder %s100, %s103
      %p112 = scmp.eq.s32.totalorder %s27, 1
      %p113 = por %p111, %p112
      %p114 = scmp.ne.s32.totalorder %s103, %s104
      %p115 = scmp.eq.s32.totalorder %s27, 0
      %p116 = por %p114, %p115
      %p117 = scmp.ne.s32.totalorder %s103, %s104
      %p118 = scmp.eq.s32.totalorder %s28, 1
      %p119 = por %p117, %p118
      %p121 = scmp.ne.s32.totalorder %s104, %s120
      %p122 = scmp.eq.s32.totalorder %s28, 0
      %p123 = por %p121, %p122
      %s124 = ssub.s32 %s29, %s41
      %p125 = scmp.eq.s32.totalorder %s124, 0
      %s127 = sadd.s32 %s126, 1
      %s128 = scalar_select %p125, %s126, %s127
      %p131 = pneg %p125
      %p132 = scmp.eq.s32.totalorder %s22, 1
      %p133 = por %p131, %p132
      %p134 = scmp.ne.s32.totalorder %s126, %s129
      %p135 = scmp.eq.s32.totalorder %s22, 0
      %p136 = por %p134, %p135
      %p137 = scmp.ne.s32.totalorder %s126, %s129
      %p138 = scmp.eq.s32.totalorder %s27, 1
      %p139 = por %p137, %p138
      %p140 = scmp.ne.s32.totalorder %s129, %s130
      %p141 = scmp.eq.s32.totalorder %s27, 0
      %p142 = por %p140, %p141
      %p143 = scmp.ne.s32.totalorder %s129, %s130
      %p144 = scmp.eq.s32.totalorder %s28, 1
      %p145 = por %p143, %p144
      %p147 = scmp.ne.s32.totalorder %s130, %s146
      %p148 = scmp.eq.s32.totalorder %s28, 0
      %p149 = por %p147, %p148
      %p150 = scmp.le.s32.totalorder 1, %s22
      %p151 = scmp.lt.s32.totalorder %s22, 3
      %p152 = pnand %p150, %p151
      %p153 = pneg %p152
      // Predicated region
      $region9: #{tpu_custom_call.1} parent=5 // pred_check
        _
      $region10: #{tpu_custom_call.1} parent=5 // pred_check_branch
        %155 = sbr.rel (%p152) target = $region12
      $region11: #{tpu_custom_call.1} parent=5 // pred_region
        %s156 = ssub.s32 %s22, 1
      $region12: #{tpu_custom_call.1} parent=5 // pred_fallthru
        _
      %p157 = scmp.lt.s32.totalorder %s22, 2
      // Predicated region
      $region13: #{tpu_custom_call.1} parent=5 // pred_check
        %p158 = pneg %p157
      $region14: #{tpu_custom_call.1} parent=5 // pred_check_branch
        %160 = sbr.rel (%p158) target = $region16
      $region15: #{tpu_custom_call.1} parent=5 // pred_region
        // Predicated region
        $region17: #{tpu_custom_call.1} parent=15 // pred_check
          %p161 = pneg %p56
        $region18: #{tpu_custom_call.1} parent=15 // pred_check_branch
          %163 = sbr.rel (%p161) target = $region20
        $region19: #{tpu_custom_call.1} parent=15 // pred_region
          %s164 = sand.u32 %s46, 1
          %s165 = scalar_lea.sflag [#allocation3], %s164
          %s166 = sand.u32 %s46, 1
          %s167 = smul.addr %s166, 8
          %s168 = scalar_lea.vmem [#allocation2], %s167
          %s169 = sadd.s32 %s29, %s30
          %s171 = ssub.s32 128, 128
          %172 = vsyncadd %s165, %s171
          %s173 = smul.addr %s169, 128
          %s174 = scalar_lea.hbm %s0, %s173
          %s176 = sshll.u32 %s168, 4
          %s177 = int_to_ptr.vmem [resolvable:$true] %s176
          %179 = dma.hbm_to_vmem [thread:$0]  %s174, 128, %s177, %s165
        $region20: #{tpu_custom_call.1} parent=15 // pred_fallthru
          _
        // Predicated region
        $region21: #{tpu_custom_call.1} parent=15 // pred_check
          %p180 = pneg %p84
        $region22: #{tpu_custom_call.1} parent=15 // pred_check_branch
          %182 = sbr.rel (%p180) target = $region24
        $region23: #{tpu_custom_call.1} parent=15 // pred_region
          %s183 = sand.u32 %s74, 1
          %s184 = scalar_lea.sflag [#allocation6], %s183
          %s185 = sand.u32 %s74, 1
          %s186 = smul.addr %s185, 8
          %s187 = scalar_lea.vmem [#allocation5], %s186
          %s188 = sadd.s32 %s29, %s30
          %s190 = ssub.s32 128, 128
          %191 = vsyncadd %s184, %s190
          %s192 = smul.addr %s188, 128
          %s193 = scalar_lea.hbm %s1, %s192
          %s195 = sshll.u32 %s187, 4
          %s196 = int_to_ptr.vmem [resolvable:$true] %s195
          %198 = dma.hbm_to_vmem [thread:$0]  %s193, 128, %s196, %s184
        $region24: #{tpu_custom_call.1} parent=15 // pred_fallthru
          _
      $region16: #{tpu_custom_call.1} parent=5 // pred_fallthru
        _
      %p199 = scmp.le.s32.totalorder 1, %s22
      %p200 = scmp.lt.s32.totalorder %s22, 3
      %p201 = pnand %p199, %p200
      %p202 = pneg %p201
      // Predicated region
      $region25: #{tpu_custom_call.1} parent=5 // pred_check
        _
      $region26: #{tpu_custom_call.1} parent=5 // pred_check_branch
        %204 = sbr.rel (%p201) target = $region28
      $region27: #{tpu_custom_call.1} parent=5 // pred_region
        %s205 = ssub.s32 %s22, 1
        %s206 = sand.u32 %s49, 1
        %s207 = scalar_lea.sflag [#allocation3], %s206
        %s208 = sand.u32 %s49, 1
        %s209 = smul.addr %s208, 8
        %s210 = scalar_lea.vmem [#allocation2], %s209
        // Predicated region
        $region29: #{tpu_custom_call.1} parent=27 // pred_check
          %p211 = pneg %p62
        $region30: #{tpu_custom_call.1} parent=27 // pred_check_branch
          %213 = sbr.rel (%p211) target = $region32
        $region31: #{tpu_custom_call.1} parent=27 // pred_region
          %214 = dma.done %s207, 128
        $region32: #{tpu_custom_call.1} parent=27 // pred_fallthru
          _
        %s215 = sand.u32 %s77, 1
        %s216 = scalar_lea.sflag [#allocation6], %s215
        %s217 = sand.u32 %s77, 1
        %s218 = smul.addr %s217, 8
        %s219 = scalar_lea.vmem [#allocation5], %s218
        // Predicated region
        $region33: #{tpu_custom_call.1} parent=27 // pred_check
          %p220 = pneg %p90
        $region34: #{tpu_custom_call.1} parent=27 // pred_check_branch
          %222 = sbr.rel (%p220) target = $region36
        $region35: #{tpu_custom_call.1} parent=27 // pred_region
          %223 = dma.done %s216, 128
        $region36: #{tpu_custom_call.1} parent=27 // pred_fallthru
          _
        %s224 = sand.u32 %s49, 1
        %s225 = scalar_lea.sflag [#allocation3], %s224
        %s226 = sand.u32 %s49, 1
        %s227 = smul.addr %s226, 8
        %s228 = scalar_lea.vmem [#allocation2], %s227
        %p229 = pneg %p62
        %p230 = pneg %p59
        %s231 = sand.u32 %s77, 1
        %s232 = scalar_lea.sflag [#allocation6], %s231
        %s233 = sand.u32 %s77, 1
        %s234 = smul.addr %s233, 8
        %s235 = scalar_lea.vmem [#allocation5], %s234
        %p236 = pneg %p90
        %p237 = pneg %p87
        %p238 = pneg %p116
        %p239 = pneg %p113
        %s240 = sand.u32 %s103, 1
        %s241 = scalar_lea.sflag [#allocation4], %s240
        %s242 = sand.u32 %s103, 1
        %s243 = smul.addr %s242, 8
        %s244 = scalar_lea.vmem [#allocation7], %s243
        %p245 = pneg %p142
        %p246 = pneg %p139
        %s247 = sand.u32 %s129, 1
        %s248 = scalar_lea.sflag [#allocation9], %s247
        %s249 = sand.u32 %s129, 1
        %s250 = smul.addr %s249, 8
        %s251 = scalar_lea.vmem [#allocation8], %s250
        %s252 = sadd.s32 %s31, %s32
        %s253 = sadd.s32 %s31, %s32
        %p254 = scmp.eq.s32.totalorder %s32, 0
        // Predicated region
        $region37: #{tpu_custom_call.1} parent=27 // pred_check
          %p255 = pneg %p254
        $region38: #{tpu_custom_call.1} parent=27 // pred_check_branch
          %257 = sbr.rel (%p255) target = $region40
        $region39: #{tpu_custom_call.1} parent=27 // pred_region
          %258 = vst [vmem:[%s244] sm:$0xff] 0.0
          %259 = vst [vmem:[%s251] sm:$0xff] 0.0
        $region40: #{tpu_custom_call.1} parent=27 // pred_fallthru
          _
        %v260 = vld [vmem:[%s210] sm:$0xff]
        %v261 = vld [vmem:[%s219] sm:$0xff]
        %vm262 = vcmp.ge.f32.partialorder %v260, 0.5
        %v263 = vsel %vm262, %v261, 0.0
        %v264 = vsel %vm262, 1, 0
        %v265 = vcvt.s32.f32 %v264
        %v266 = vadd.f32 %v261, %v265
        %v267 = vld [vmem:[%s244] sm:$0xff]
        %v268 = vadd.f32 %v263, 0.0
        %v269 = vadd.f32 %v267, %v268
        %270 = vst [vmem:[%s244] sm:$0xff] %v269
        %v271 = vld [vmem:[%s251] sm:$0xff]
        %v272 = vadd.f32 %v266, 0.0
        %v273 = vadd.f32 %v271, %v272
        %274 = vst [vmem:[%s251] sm:$0xff] %v273
        %s275 = sand.u32 %s103, 1
        %s276 = scalar_lea.sflag [#allocation4], %s275
        %s277 = sand.u32 %s103, 1
        %s278 = smul.addr %s277, 8
        %s279 = scalar_lea.vmem [#allocation7], %s278
        %s280 = sand.u32 %s129, 1
        %s281 = scalar_lea.sflag [#allocation9], %s280
        %s282 = sand.u32 %s129, 1
        %s283 = smul.addr %s282, 8
        %s284 = scalar_lea.vmem [#allocation8], %s283
        // Predicated region
        $region41: #{tpu_custom_call.1} parent=27 // pred_check
          %p285 = pneg %p113
        $region42: #{tpu_custom_call.1} parent=27 // pred_check_branch
          %287 = sbr.rel (%p285) target = $region44
        $region43: #{tpu_custom_call.1} parent=27 // pred_region
          %s289 = ssub.s32 128, 128
          %290 = vsyncadd %s276, %s289
          %s291 = smul.addr %s31, 128
          %s292 = scalar_lea.hbm %s2, %s291
          %s294 = sshll.u32 %s279, 4
          %s295 = int_to_ptr.vmem [resolvable:$true] %s294
          %297 = dma.vmem_to_hbm [thread:$0]  %s295, 128, %s292, %s276
        $region44: #{tpu_custom_call.1} parent=27 // pred_fallthru
          _
        // Predicated region
        $region45: #{tpu_custom_call.1} parent=27 // pred_check
          %p298 = pneg %p139
        $region46: #{tpu_custom_call.1} parent=27 // pred_check_branch
          %300 = sbr.rel (%p298) target = $region48
        $region47: #{tpu_custom_call.1} parent=27 // pred_region
          %s302 = ssub.s32 128, 128
          %303 = vsyncadd %s281, %s302
          %s304 = smul.addr %s31, 128
          %s305 = scalar_lea.hbm %s3, %s304
          %s307 = sshll.u32 %s284, 4
          %s308 = int_to_ptr.vmem [resolvable:$true] %s307
          %310 = dma.vmem_to_hbm [thread:$0]  %s308, 128, %s305, %s281
        $region48: #{tpu_custom_call.1} parent=27 // pred_fallthru
          _
      $region28: #{tpu_custom_call.1} parent=5 // pred_fallthru
        _
      %p311 = scmp.le.s32.totalorder 2, %s22
      // Predicated region
      $region49: #{tpu_custom_call.1} parent=5 // pred_check
        %p312 = pneg %p311
      $region50: #{tpu_custom_call.1} parent=5 // pred_check_branch
        %314 = sbr.rel (%p312) target = $region52
      $region51: #{tpu_custom_call.1} parent=5 // pred_region
        %s315 = ssub.s32 %s22, 2
        // Predicated region
        $region53: #{tpu_custom_call.1} parent=51 // pred_check
          %p316 = pneg %p119
        $region54: #{tpu_custom_call.1} parent=51 // pred_check_branch
          %318 = sbr.rel (%p316) target = $region56
        $region55: #{tpu_custom_call.1} parent=51 // pred_region
          %s319 = sand.u32 %s104, 1
          %s320 = scalar_lea.sflag [#allocation4], %s319
          %s321 = sand.u32 %s104, 1
          %s322 = smul.addr %s321, 8
          %s323 = scalar_lea.vmem [#allocation7], %s322
          %324 = dma.done %s320, 128
        $region56: #{tpu_custom_call.1} parent=51 // pred_fallthru
          _
        // Predicated region
        $region57: #{tpu_custom_call.1} parent=51 // pred_check
          %p325 = pneg %p145
        $region58: #{tpu_custom_call.1} parent=51 // pred_check_branch
          %327 = sbr.rel (%p325) target = $region60
        $region59: #{tpu_custom_call.1} parent=51 // pred_region
          %s328 = sand.u32 %s130, 1
          %s329 = scalar_lea.sflag [#allocation9], %s328
          %s330 = sand.u32 %s130, 1
          %s331 = smul.addr %s330, 8
          %s332 = scalar_lea.vmem [#allocation8], %s331
          %333 = dma.done %s329, 128
        $region60: #{tpu_custom_call.1} parent=51 // pred_fallthru
          _
      $region52: #{tpu_custom_call.1} parent=5 // pred_fallthru
        _
    $region6: #{tpu_custom_call.1} parent=1 // loop_footer
      %s26 = sadd.s32 1, %s22
    $region7: #{tpu_custom_call.1} parent=1 // loop_footer_branch
      %21 = sbr.rel target = $region3
    $region8: #{tpu_custom_call.1} parent=1 // loop_exit
      _
    %334 = vsyncpa [#allocation3], 1
    %s335 = scalar_lea.sflag [#allocation3], 1
    %336 = vsyncpa %s335, 1
    %337 = vsyncpa [#allocation6], 1
    %s338 = scalar_lea.sflag [#allocation6], 1
    %339 = vsyncpa %s338, 1
    %340 = vsyncpa [#allocation4], 1
    %s341 = scalar_lea.sflag [#allocation4], 1
    %342 = vsyncpa %s341, 1
    %343 = vsyncpa [#allocation9], 1
    %s344 = scalar_lea.sflag [#allocation9], 1
    %345 = vsyncpa %s344, 1

</llo_original>
